<compile_context>
chip_gen: v6e
topology: v6e:2x2x1
jax: 0.10.0
libtpu: 0.0.40
codegen_flags: <defaults>
</compile_context>

<pallas_src>
import jax
import jax.numpy as jnp
from jax.experimental import pallas as pl
from jax.experimental.pallas import tpu as pltpu


NEGATIVE_SLOPE = 0.01     # torch.nn.LeakyReLU default
LANE = 128                # lane width  -> pad feature dims to multiples of this
SUBLANE = 8               # sublane width -> pad batch to multiples of this
TM_MAX = 256              # max batch-tile rows per grid step


def _round_up(x, m):
    return (x + m - 1) // m * m


def _make_fused_dense_kernel(n_layers):
    """Kernel: o = L_{n-1}(...L_0(x))  with L(h) = leaky_relu(h @ W + b)."""

    def kernel(x_ref, *refs):
        o_ref = refs[-1]
        wb = refs[:-1]                       # (w0, b0, w1, b1, ...)
        h = x_ref[...]                       # bf16 (tm, H0_pad)
        y = None
        for l in range(n_layers):            # static unroll over layers
            w = wb[2 * l][...]                # bf16 (Hin_pad, Hout_pad)
            b = wb[2 * l + 1][...]            # f32  (1, Hout_pad)
            y = jnp.dot(h, w, preferred_element_type=jnp.float32) + b
            y = jnp.where(y >= 0, y, NEGATIVE_SLOPE * y)   # f32 epilogue
            if l < n_layers - 1:
                h = y.astype(jnp.bfloat16)    # feed next layer's MXU in bf16
        o_ref[...] = y.astype(o_ref.dtype)

    return kernel


def _dense_fused_call(x2d_pad, padded_params, h_last_pad):
    """Single pallas_call over the whole padded layer stack."""
    n_pad, h0_pad = x2d_pad.shape
    tm = min(TM_MAX, n_pad)
    grid_b = n_pad // tm
    n_layers = len(padded_params)

    in_specs = [pl.BlockSpec((tm, h0_pad), lambda i: (i, 0))]
    flat_inputs = [x2d_pad]
    for w, b in padded_params:
        in_specs.append(pl.BlockSpec(w.shape, lambda i: (0, 0)))   # resident
        in_specs.append(pl.BlockSpec(b.shape, lambda i: (0, 0)))   # resident
        flat_inputs.extend([w, b])

    return pl.pallas_call(
        _make_fused_dense_kernel(n_layers),
        out_shape=jax.ShapeDtypeStruct((n_pad, h_last_pad), jnp.float32),
        grid_spec=pltpu.PrefetchScalarGridSpec(
            num_scalar_prefetch=0,
            grid=(grid_b,),
            in_specs=in_specs,
            out_specs=pl.BlockSpec((tm, h_last_pad), lambda i: (i, 0)),
        ),
        compiler_params=pltpu.CompilerParams(
            dimension_semantics=("parallel",),          # batch axis -> 2 TCs on v7x
            vmem_limit_bytes=32 * 1024 * 1024,
        ),
    )(*flat_inputs)


def init_dense_params(key, features, bias=True):
    """Deterministic init mimicking nn.Linear: U(-1/sqrt(fan_in), 1/sqrt(fan_in)).

    Weights are stored (H_in, H_out) so the kernel computes x @ W + b directly
    (transpose of PyTorch's (out, in) layout; same math as x @ W_pt.T + b).
    """
    params = []
    for n_in, n_out in zip(features, features[1:]):
        key, kw, kb = jax.random.split(key, 3)
        bound = 1.0 / jnp.sqrt(jnp.float32(n_in))
        w = jax.random.uniform(kw, (n_in, n_out), jnp.float32, -bound, bound)
        if bias:
            b = jax.random.uniform(kb, (1, n_out), jnp.float32, -bound, bound)
        else:
            b = jnp.zeros((1, n_out), jnp.float32)
        params.append((w, b))
    return params


@jax.jit
def dense_forward(x, params):
    """Dense.forward: sequential (Linear -> LeakyReLU) layers, fused on TPU.

    Accepts x of shape (N, *, H_in); flattens leading dims for the kernel and
    restores them afterwards (mirrors nn.Linear broadcasting semantics).
    """
    lead_shape = x.shape[:-1]
    h_in = x.shape[-1]
    h_out = params[-1][0].shape[1]

    x2d = x.reshape(-1, h_in).astype(jnp.float32)
    n = x2d.shape[0]

    # Pad batch to a sublane-friendly tile count and features to lane multiples.
    h_in_pad = max(LANE, _round_up(h_in, LANE))
    if n <= TM_MAX:
        n_pad = _round_up(max(n, SUBLANE), SUBLANE)
    else:
        n_pad = _round_up(n, TM_MAX)
    x2d_pad = jnp.pad(x2d, ((0, n_pad - n), (0, h_in_pad - h_in)))
    x2d_pad = x2d_pad.astype(jnp.bfloat16)          # halve HBM traffic for x

    padded_params = []
    prev_pad = h_in_pad
    last_pad = h_in_pad
    for w, b in params:
        hi, ho = w.shape
        ho_pad = max(LANE, _round_up(ho, LANE))
        w_p = jnp.pad(w, ((0, prev_pad - hi), (0, ho_pad - ho))).astype(jnp.bfloat16)
        b_p = jnp.pad(b, ((0, 0), (0, ho_pad - ho))).astype(jnp.float32)
        padded_params.append((w_p, b_p))
        prev_pad = ho_pad
        last_pad = ho_pad

    out = _dense_fused_call(x2d_pad, padded_params, last_pad)
    out = out[:n, :h_out]
    return out.reshape(*lead_shape, h_out)


def dense_reference(x, params):
    """Pure-JAX f32 reference of Dense.forward."""
    lead_shape = x.shape[:-1]
    h = x.reshape(-1, x.shape[-1]).astype(jnp.float32)
    for w, b in params:
        h = h @ w + b
        h = jnp.where(h >= 0, h, NEGATIVE_SLOPE * h)
    return h.reshape(*lead_shape, h.shape[-1])


if __name__ == "__main__":
    key = jax.random.PRNGKey(0)
    key, kx = jax.random.split(key)

    # Dense(32, 64, 16): two (Linear + LeakyReLU) layers.
    features = (32, 64, 16)
    params = init_dense_params(key, features, bias=True)

    # Input shape (N, *, H_in) = (2, 8, 32)
    x = jax.random.normal(kx, (2, 8, 32), jnp.float32)

    out = dense_forward(x, params)
    jax.block_until_ready(out)

    assert out.shape == (2, 8, 16), out.shape

    # Loose tolerance: kernel feeds the MXU bf16 inputs (f32 accumulation).
    ref = dense_reference(x, params)
    max_err = float(jnp.max(jnp.abs(out - ref)))
    assert max_err < 1e-1, f"max abs error vs f32 reference: {max_err}"

    print("KERNEL_OK")
</pallas_src>

<mosaic_0001>
module attributes {stable_mosaic.version = 11 : i64} {
  func.func @kernel(%arg0: i32, %arg1: memref<16x128xbf16, #tpu.memory_space<vmem>>, %arg2: memref<128x128xbf16, #tpu.memory_space<vmem>>, %arg3: memref<1x128xf32, #tpu.memory_space<vmem>>, %arg4: memref<128x128xbf16, #tpu.memory_space<vmem>>, %arg5: memref<1x128xf32, #tpu.memory_space<vmem>>, %arg6: memref<16x128xf32, #tpu.memory_space<vmem>>) attributes {dimension_semantics = [#tpu.dimension_semantics<parallel>], iteration_bounds = array<i64: 1>, scalar_prefetch = 0 : i64, scratch_operands = 0 : i64, tpu.core_type = #tpu.core_type<tc>, window_params = [{transform_indices = @transform_0, window_bounds = array<i64: 16, 128>}, {pipeline_mode = #tpu.pipeline_mode<synchronous>, transform_indices = @transform_1, window_bounds = array<i64: 128, 128>}, {pipeline_mode = #tpu.pipeline_mode<synchronous>, transform_indices = @transform_2, window_bounds = array<i64: 1, 128>}, {pipeline_mode = #tpu.pipeline_mode<synchronous>, transform_indices = @transform_3, window_bounds = array<i64: 128, 128>}, {pipeline_mode = #tpu.pipeline_mode<synchronous>, transform_indices = @transform_4, window_bounds = array<i64: 1, 128>}, {transform_indices = @transform_5, window_bounds = array<i64: 16, 128>}]} {
    %c0 = arith.constant 0 : index
    %c0_0 = arith.constant 0 : index
    %0 = vector.load %arg1[%c0, %c0_0] : memref<16x128xbf16, #tpu.memory_space<vmem>>, vector<16x128xbf16>
    %c0_1 = arith.constant 0 : index
    %c0_2 = arith.constant 0 : index
    %1 = vector.load %arg2[%c0_1, %c0_2] : memref<128x128xbf16, #tpu.memory_space<vmem>>, vector<128x128xbf16>
    %c0_3 = arith.constant 0 : index
    %c0_4 = arith.constant 0 : index
    %2 = vector.load %arg3[%c0_3, %c0_4] : memref<1x128xf32, #tpu.memory_space<vmem>>, vector<1x128xf32>
    %cst = arith.constant dense<0.000000e+00> : vector<16x128xf32>
    %3 = tpu.matmul %0, %1, %cst {dimension_numbers = #tpu.dot_dimension_numbers<[1], [0], [0], [1], [0, 0, 1, 1], [], []>} : vector<16x128xbf16>, vector<128x128xbf16>, vector<16x128xf32> -> vector<16x128xf32>
    %4 = vector.broadcast %2 : vector<1x128xf32> to vector<16x128xf32>
    %5 = arith.addf %3, %4 : vector<16x128xf32>
    %cst_5 = arith.constant 0.000000e+00 : f32
    %6 = vector.broadcast %cst_5 : f32 to vector<16x128xf32>
    %7 = arith.cmpf oge, %5, %6 : vector<16x128xf32>
    %cst_6 = arith.constant 0.00999999977 : f32
    %8 = vector.broadcast %cst_6 : f32 to vector<16x128xf32>
    %9 = arith.mulf %8, %5 : vector<16x128xf32>
    %10 = arith.select %7, %5, %9 : vector<16x128xi1>, vector<16x128xf32>
    %11 = arith.truncf %10 : vector<16x128xf32> to vector<16x128xbf16>
    %c0_7 = arith.constant 0 : index
    %c0_8 = arith.constant 0 : index
    %12 = vector.load %arg4[%c0_7, %c0_8] : memref<128x128xbf16, #tpu.memory_space<vmem>>, vector<128x128xbf16>
    %c0_9 = arith.constant 0 : index
    %c0_10 = arith.constant 0 : index
    %13 = vector.load %arg5[%c0_9, %c0_10] : memref<1x128xf32, #tpu.memory_space<vmem>>, vector<1x128xf32>
    %cst_11 = arith.constant dense<0.000000e+00> : vector<16x128xf32>
    %14 = tpu.matmul %11, %12, %cst_11 {dimension_numbers = #tpu.dot_dimension_numbers<[1], [0], [0], [1], [0, 0, 1, 1], [], []>} : vector<16x128xbf16>, vector<128x128xbf16>, vector<16x128xf32> -> vector<16x128xf32>
    %15 = vector.broadcast %13 : vector<1x128xf32> to vector<16x128xf32>
    %16 = arith.addf %14, %15 : vector<16x128xf32>
    %cst_12 = arith.constant 0.000000e+00 : f32
    %17 = vector.broadcast %cst_12 : f32 to vector<16x128xf32>
    %18 = arith.cmpf oge, %16, %17 : vector<16x128xf32>
    %cst_13 = arith.constant 0.00999999977 : f32
    %19 = vector.broadcast %cst_13 : f32 to vector<16x128xf32>
    %20 = arith.mulf %19, %16 : vector<16x128xf32>
    %21 = arith.select %18, %16, %20 : vector<16x128xi1>, vector<16x128xf32>
    %c0_14 = arith.constant 0 : index
    %c0_15 = arith.constant 0 : index
    %22 = vector.load %arg6[%c0_14, %c0_15] : memref<16x128xf32, #tpu.memory_space<vmem>>, vector<16x128xf32>
    tpu.vector_store %arg6[%c0_14, %c0_15], %21 {strides = array<i32>} : memref<16x128xf32, #tpu.memory_space<vmem>>, vector<16x128xf32>,
    return
  }
  func.func @transform_0(%arg0: i32) -> (i32, i32) {
    %c0_i32 = arith.constant 0 : i32
    %c0_i32_0 = arith.constant 0 : i32
    return %arg0, %c0_i32 : i32, i32
  }
  func.func @transform_1(%arg0: i32) -> (i32, i32) {
    %c0_i32 = arith.constant 0 : i32
    %c0_i32_0 = arith.constant 0 : i32
    %c0_i32_1 = arith.constant 0 : i32
    return %c0_i32, %c0_i32_0 : i32, i32
  }
  func.func @transform_2(%arg0: i32) -> (i32, i32) {
    %c0_i32 = arith.constant 0 : i32
    %c0_i32_0 = arith.constant 0 : i32
    %c0_i32_1 = arith.constant 0 : i32
    return %c0_i32, %c0_i32_0 : i32, i32
  }
  func.func @transform_3(%arg0: i32) -> (i32, i32) {
    %c0_i32 = arith.constant 0 : i32
    %c0_i32_0 = arith.constant 0 : i32
    %c0_i32_1 = arith.constant 0 : i32
    return %c0_i32, %c0_i32_0 : i32, i32
  }
  func.func @transform_4(%arg0: i32) -> (i32, i32) {
    %c0_i32 = arith.constant 0 : i32
    %c0_i32_0 = arith.constant 0 : i32
    %c0_i32_1 = arith.constant 0 : i32
    return %c0_i32, %c0_i32_0 : i32, i32
  }
  func.func @transform_5(%arg0: i32) -> (i32, i32) {
    %c0_i32 = arith.constant 0 : i32
    %c0_i32_0 = arith.constant 0 : i32
    return %arg0, %c0_i32 : i32, i32
  }
}

</mosaic_0001>

<llo_original>
// kernel: dense_forward.1
$region0: #{dense_forward.1}
  #allocation0 [shape = 'u32[]', space=smem, size = 0x4, offset = 0x4, fixed_abs, tag = 'smem constant byte address 0x4 - core index']
  #allocation1 [shape = 'u32[144,128]{1,0:T(1,128)}', space=vmem, size = 0x12000, scoped, tag = 'internal scratch']
  %s0 = inlined_call_operand.vmem [shape: bf16[16,128], index: 0, kind: input, shape index: {}]
  %s1 = inlined_call_operand.vmem [shape: bf16[128,128], index: 1, kind: input, shape index: {}]
  %s2 = inlined_call_operand.vmem [shape: f32[1,128], index: 2, kind: input, shape index: {}]
  %s3 = inlined_call_operand.vmem [shape: bf16[128,128], index: 3, kind: input, shape index: {}]
  %s4 = inlined_call_operand.vmem [shape: f32[1,128], index: 4, kind: input, shape index: {}]
  %s5 = inlined_call_operand.vmem [shape: f32[16,128], index: 5, kind: output, shape index: {}]
  %s6 = sld [smem:[#allocation0]]
  $region30: #{dense_forward.1} parent=0
    _
  %s8 = ssub.s32 1, %s6
  %s9 = scalar_select 0, %s8, %s6
  // Predicated region
  $region2: #{dense_forward.1} parent=0 // pred_check
    _
  $region3: #{dense_forward.1} parent=0 // pred_check_branch
    %11 = sbr.rel (0) target = $region5
  $region4: #{dense_forward.1} parent=0 // pred_region
    _
  $region5: #{dense_forward.1} parent=0 // pred_fallthru
    _
  // Predicated region
  $region6: #{dense_forward.1} parent=0 // pred_check
    _
  $region7: #{dense_forward.1} parent=0 // pred_check_branch
    %13 = sbr.rel (0) target = $region9
  $region8: #{dense_forward.1} parent=0 // pred_region
    _
  $region9: #{dense_forward.1} parent=0 // pred_fallthru
    _
  // Predicated region
  $region10: #{dense_forward.1} parent=0 // pred_check
    _
  $region11: #{dense_forward.1} parent=0 // pred_check_branch
    %15 = sbr.rel (0) target = $region13
  $region12: #{dense_forward.1} parent=0 // pred_region
    _
  $region13: #{dense_forward.1} parent=0 // pred_fallthru
    _
  // Predicated region
  $region14: #{dense_forward.1} parent=0 // pred_check
    _
  $region15: #{dense_forward.1} parent=0 // pred_check_branch
    %17 = sbr.rel (0) target = $region17
  $region16: #{dense_forward.1} parent=0 // pred_region
    _
  $region17: #{dense_forward.1} parent=0 // pred_fallthru
    _
  // Predicated region
  $region18: #{dense_forward.1} parent=0 // pred_check
    _
  $region19: #{dense_forward.1} parent=0 // pred_check_branch
    %19 = sbr.rel (0) target = $region21
  $region20: #{dense_forward.1} parent=0 // pred_region
    _
  $region21: #{dense_forward.1} parent=0 // pred_fallthru
    _
  %v21 = vld [vmem:[%s0] sm:$0xf]
  %v22 = vld [vmem:[%s0 + $0x4] sm:$0xf]
  %v23 = vld [vmem:[%s1] sm:$0xf]
  %v24 = vld [vmem:[%s1 + $0x4] sm:$0xf]
  %v25 = vld [vmem:[%s1 + $0x8] sm:$0xf]
  %v26 = vld [vmem:[%s1 + $0xc] sm:$0xf]
  %v27 = vld [vmem:[%s1 + $0x10] sm:$0xf]
  %v28 = vld [vmem:[%s1 + $0x14] sm:$0xf]
  %v29 = vld [vmem:[%s1 + $0x18] sm:$0xf]
  %v30 = vld [vmem:[%s1 + $0x1c] sm:$0xf]
  %v31 = vld [vmem:[%s1 + $0x20] sm:$0xf]
  %v32 = vld [vmem:[%s1 + $0x24] sm:$0xf]
  %v33 = vld [vmem:[%s1 + $0x28] sm:$0xf]
  %v34 = vld [vmem:[%s1 + $0x2c] sm:$0xf]
  %v35 = vld [vmem:[%s1 + $0x30] sm:$0xf]
  %v36 = vld [vmem:[%s1 + $0x34] sm:$0xf]
  %v37 = vld [vmem:[%s1 + $0x38] sm:$0xf]
  %v38 = vld [vmem:[%s1 + $0x3c] sm:$0xf]
  %v39 = vld [vmem:[%s2] sm:$0x1]
  %v41 = vlaneseq
  %v42 = vshrl.u32 %v41, 7
  %v43 = vsub.s32 0, %v42
  %v44 = vrot.slane %v39, %v43
  %v48 = vunpack.c.l.b16 %v21
  %v49 = vunpack.c.l.b16 %v22
  %v50 = vpack.c.b16 %v49, %v48
  %v68 = vunpack.c.l.b16 %v23
  %v69 = vunpack.c.l.b16 %v24
  %v70 = vunpack.c.l.b16 %v25
  %v71 = vunpack.c.l.b16 %v26
  %v72 = vunpack.c.l.b16 %v27
  %v73 = vunpack.c.l.b16 %v28
  %v74 = vunpack.c.l.b16 %v29
  %v75 = vunpack.c.l.b16 %v30
  %v76 = vunpack.c.l.b16 %v31
  %v77 = vunpack.c.l.b16 %v32
  %v78 = vunpack.c.l.b16 %v33
  %v79 = vunpack.c.l.b16 %v34
  %v80 = vunpack.c.l.b16 %v35
  %v81 = vunpack.c.l.b16 %v36
  %v82 = vunpack.c.l.b16 %v37
  %v83 = vunpack.c.l.b16 %v38
  %v84 = vpack.c.b16 %v69, %v68
  %v85 = vpack.c.b16 %v71, %v70
  %v86 = vpack.c.b16 %v73, %v72
  %v87 = vpack.c.b16 %v75, %v74
  %v88 = vpack.c.b16 %v77, %v76
  %v89 = vpack.c.b16 %v79, %v78
  %v90 = vpack.c.b16 %v81, %v80
  %v91 = vpack.c.b16 %v83, %v82
  %100 = vmatprep.subr.bf16.mxu0 0
  %101 = vmatpush1.bf16.msra.mxu0 %v91
  %102 = vmatprep.subr.bf16.mxu0 0
  %103 = vmatpush1.bf16.msra.mxu0 %v90
  %104 = vmatprep.subr.bf16.mxu0 0
  %105 = vmatpush1.bf16.msra.mxu0 %v89
  %106 = vmatprep.subr.bf16.mxu0 0
  %107 = vmatpush1.bf16.msra.mxu0 %v88
  %108 = vmatprep.subr.bf16.mxu0 0
  %109 = vmatpush1.bf16.msra.mxu0 %v87
  %110 = vmatprep.subr.bf16.mxu0 0
  %111 = vmatpush1.bf16.msra.mxu0 %v86
  %112 = vmatprep.subr.bf16.mxu0 0
  %113 = vmatpush1.bf16.msra.mxu0 %v85
  %114 = vmatprep.subr.bf16.mxu0 0
  %115 = vmatpush1.bf16.msra.mxu0 %v84
  %116 = vmatprep.subr.bf16.mxu0 0
  %117 = vmatpush2.bf16.msra.mxu0 0
  %118 = vmatprep.subr.bf16.mxu0 0
  %119 = vmatpush2.bf16.msra.mxu0 0
  %120 = vmatprep.subr.bf16.mxu0 0
  %121 = vmatpush2.bf16.msra.mxu0 0
  %122 = vmatprep.subr.bf16.mxu0 0
  %123 = vmatpush2.bf16.msra.mxu0 0
  %124 = vmatprep.subr.bf16.mxu0 0
  %125 = vmatpush2.bf16.msra.mxu0 0
  %126 = vmatprep.subr.bf16.mxu0 0
  %127 = vmatpush2.bf16.msra.mxu0 0
  %128 = vmatprep.subr.bf16.mxu0 0
  %129 = vmatpush2.bf16.msra.mxu0 0
  %130 = vmatprep.subr.bf16.mxu0 0
  %131 = vmatpush2.bf16.msra.mxu0 0
  %132 = vmatprep.mubr.bf16.mxu0 0
  %133 = vmatmul.mubr.bf16.gmra.mxu0 %v50
  %v134 = vpop.f32.mrf.mxu0
  %v135 = vadd.f32 %v44, %v134
  %v136 = vpop.f32.mrf.mxu0
  %v137 = vpop.f32.mrf.mxu0
  %v138 = vadd.f32 %v44, %v137
  %v139 = vpop.f32.mrf.mxu0
  %140 = vdwg.mxu0
  %vm141 = vcmp.ge.f32.partialorder %v135, 0.0
  %vm142 = vcmp.ge.f32.partialorder %v138, 0.0
  %v143 = vmul.f32 %v135, 0.01
  %v144 = vmul.f32 %v138, 0.01
  %v145 = vsel %vm141, %v135, %v143
  %v146 = vsel %vm142, %v138, %v144
  %v147 = vpack.c.bf16 %v146, %v145
  %v148 = vld [vmem:[%s3] sm:$0xf]
  %v149 = vld [vmem:[%s3 + $0x4] sm:$0xf]
  %v150 = vld [vmem:[%s3 + $0x8] sm:$0xf]
  %v151 = vld [vmem:[%s3 + $0xc] sm:$0xf]
  %v152 = vld [vmem:[%s3 + $0x10] sm:$0xf]
  %v153 = vld [vmem:[%s3 + $0x14] sm:$0xf]
  %v154 = vld [vmem:[%s3 + $0x18] sm:$0xf]
  %v155 = vld [vmem:[%s3 + $0x1c] sm:$0xf]
  %v156 = vld [vmem:[%s3 + $0x20] sm:$0xf]
  %v157 = vld [vmem:[%s3 + $0x24] sm:$0xf]
  %v158 = vld [vmem:[%s3 + $0x28] sm:$0xf]
  %v159 = vld [vmem:[%s3 + $0x2c] sm:$0xf]
  %v160 = vld [vmem:[%s3 + $0x30] sm:$0xf]
  %v161 = vld [vmem:[%s3 + $0x34] sm:$0xf]
  %v162 = vld [vmem:[%s3 + $0x38] sm:$0xf]
  %v163 = vld [vmem:[%s3 + $0x3c] sm:$0xf]
  %v164 = vld [vmem:[%s4] sm:$0x1]
  %v166 = vlaneseq
  %v167 = vshrl.u32 %v166, 7
  %v168 = vsub.s32 0, %v167
  %v169 = vrot.slane %v164, %v168
  %v187 = vunpack.c.l.b16 %v148
  %v188 = vunpack.c.l.b16 %v149
  %v189 = vunpack.c.l.b16 %v150
  %v190 = vunpack.c.l.b16 %v151
  %v191 = vunpack.c.l.b16 %v152
  %v192 = vunpack.c.l.b16 %v153
  %v193 = vunpack.c.l.b16 %v154
  %v194 = vunpack.c.l.b16 %v155
  %v195 = vunpack.c.l.b16 %v156
  %v196 = vunpack.c.l.b16 %v157
  %v197 = vunpack.c.l.b16 %v158
  %v198 = vunpack.c.l.b16 %v159
  %v199 = vunpack.c.l.b16 %v160
  %v200 = vunpack.c.l.b16 %v161
  %v201 = vunpack.c.l.b16 %v162
  %v202 = vunpack.c.l.b16 %v163
  %v203 = vpack.c.b16 %v188, %v187
  %v204 = vpack.c.b16 %v190, %v189
  %v205 = vpack.c.b16 %v192, %v191
  %v206 = vpack.c.b16 %v194, %v193
  %v207 = vpack.c.b16 %v196, %v195
  %v208 = vpack.c.b16 %v198, %v197
  %v209 = vpack.c.b16 %v200, %v199
  %v210 = vpack.c.b16 %v202, %v201
  %219 = vmatprep.subr.bf16.mxu0 0
  %220 = vmatpush1.bf16.msra.mxu0 %v210
  %221 = vmatprep.subr.bf16.mxu0 0
  %222 = vmatpush1.bf16.msra.mxu0 %v209
  %223 = vmatprep.subr.bf16.mxu0 0
  %224 = vmatpush1.bf16.msra.mxu0 %v208
  %225 = vmatprep.subr.bf16.mxu0 0
  %226 = vmatpush1.bf16.msra.mxu0 %v207
  %227 = vmatprep.subr.bf16.mxu0 0
  %228 = vmatpush1.bf16.msra.mxu0 %v206
  %229 = vmatprep.subr.bf16.mxu0 0
  %230 = vmatpush1.bf16.msra.mxu0 %v205
  %231 = vmatprep.subr.bf16.mxu0 0
  %232 = vmatpush1.bf16.msra.mxu0 %v204
  %233 = vmatprep.subr.bf16.mxu0 0
  %234 = vmatpush1.bf16.msra.mxu0 %v203
  %235 = vmatprep.subr.bf16.mxu0 0
  %236 = vmatpush2.bf16.msra.mxu0 0
  %237 = vmatprep.subr.bf16.mxu0 0
  %238 = vmatpush2.bf16.msra.mxu0 0
  %239 = vmatprep.subr.bf16.mxu0 0
  %240 = vmatpush2.bf16.msra.mxu0 0
  %241 = vmatprep.subr.bf16.mxu0 0
  %242 = vmatpush2.bf16.msra.mxu0 0
  %243 = vmatprep.subr.bf16.mxu0 0
  %244 = vmatpush2.bf16.msra.mxu0 0
  %245 = vmatprep.subr.bf16.mxu0 0
  %246 = vmatpush2.bf16.msra.mxu0 0
  %247 = vmatprep.subr.bf16.mxu0 0
  %248 = vmatpush2.bf16.msra.mxu0 0
  %249 = vmatprep.subr.bf16.mxu0 0
  %250 = vmatpush2.bf16.msra.mxu0 0
  %251 = vmatprep.mubr.bf16.mxu0 0
  %252 = vmatmul.mubr.bf16.gmra.mxu0 %v147
  %v253 = vpop.f32.mrf.mxu0
  %v254 = vadd.f32 %v169, %v253
  %v255 = vpop.f32.mrf.mxu0
  %v256 = vpop.f32.mrf.mxu0
  %v257 = vadd.f32 %v169, %v256
  %v258 = vpop.f32.mrf.mxu0
  %259 = vdwg.mxu0
  %vm260 = vcmp.ge.f32.partialorder %v254, 0.0
  %vm261 = vcmp.ge.f32.partialorder %v257, 0.0
  %v262 = vmul.f32 %v254, 0.01
  %v263 = vmul.f32 %v257, 0.01
  %v264 = vsel %vm260, %v254, %v262
  %v265 = vsel %vm261, %v257, %v263
  %266 = vst [vmem:[%s5] sm:$0xff] %v264
  %267 = vst [vmem:[%s5 + $0x8] sm:$0xff] %v265
  // Predicated region
  $region22: #{dense_forward.1} parent=0 // pred_check
    _
  $region23: #{dense_forward.1} parent=0 // pred_check_branch
    %269 = sbr.rel (0) target = $region25
  $region24: #{dense_forward.1} parent=0 // pred_region
    _
  $region25: #{dense_forward.1} parent=0 // pred_fallthru
    _
  // Predicated region
  $region26: #{dense_forward.1} parent=0 // pred_check
    _
  $region27: #{dense_forward.1} parent=0 // pred_check_branch
    %271 = sbr.rel (0) target = $region29
  $region28: #{dense_forward.1} parent=0 // pred_region
    _
  $region29: #{dense_forward.1} parent=0 // pred_fallthru
    _

</llo_original>
